<compile_context>
chip_gen: v5e
topology: v5e:2x2
jax: 0.10.0
libtpu: 0.0.40
codegen_flags: <defaults>
</compile_context>

<pallas_src>
import functools

import numpy as np
import jax
import jax.numpy as jnp
from jax.experimental import pallas as pl
from jax.experimental.pallas import tpu as pltpu

EPS = 1e-5
K = 3                     # kernel_size
PAD = (K - 1) // 2        # ReflectionPad2d(1)


def convblock_kernel(x_ref, w_ref, b_ref, scale_ref, shift_ref, o_ref, xs_ref):
    """Fused BN-affine + ReLU + reflect-pad + 3x3 conv for one (n, row-tile) grid step.

    x_ref     : (1, H, W*Cin)        raw input image (lane-flattened W,C), f32
    w_ref     : (K, W*Cin, W*Cout)   banded conv weights with W-reflection folded in
    b_ref     : (1, W*Cout)          conv bias tiled across W (lane-dense), f32
    scale_ref : (1, W*Cin)           gamma / sqrt(var+eps), tiled across W, f32
    shift_ref : (1, W*Cin)           beta - mean*scale,     tiled across W, f32
    o_ref     : (1, TH, W*Cout)      lane-dense output row-tile, f32
    xs_ref    : (TH+2, W*Cin) VMEM   scratch: affine+ReLU'd rows incl. reflected H halo
    """
    TH = o_ref.shape[1]
    H = x_ref.shape[1]
    h = pl.program_id(1)
    row0 = pl.multiple_of(h * TH, TH)

    scale = scale_ref[...]
    shift = shift_ref[...]

    def bn_relu(rows):                       # f32 VPU math (v5e has no bf16 VPU)
        return jnp.maximum(rows * scale + shift, 0.0)

    # Reflected row indices for the 1-row top/bottom halo (ReflectionPad2d along H).
    top = jnp.where(row0 == 0, 1, row0 - 1)
    bot = jnp.where(row0 + TH == H, H - 2, row0 + TH)

    xs_ref[pl.ds(0, 1), :] = bn_relu(x_ref[0, pl.ds(top, 1), :])
    xs_ref[pl.ds(1, TH), :] = bn_relu(x_ref[0, pl.ds(row0, TH), :])
    xs_ref[pl.ds(TH + 1, 1), :] = bn_relu(x_ref[0, pl.ds(bot, 1), :])

    # 3x3 conv = K banded matmuls; operands cast to w_ref.dtype (bf16 by default) right at
    # the dot, accumulation stays f32 on the MXU.  Accumulator is seeded with the bias.
    acc = jnp.broadcast_to(b_ref[...], o_ref.shape[1:]).astype(jnp.float32)
    for kh in range(K):                      # short static unroll
        acc = acc + jnp.dot(xs_ref[pl.ds(kh, TH), :].astype(w_ref.dtype),
                            w_ref[kh],
                            preferred_element_type=jnp.float32)

    o_ref[0] = acc.astype(o_ref.dtype)       # dense (TH, W*Cout) store


def _pick_tile_h(H, tile_h):
    """Largest divisor of H that is <= tile_h and TPU-sublane friendly (or the full H)."""
    for d in range(min(tile_h, H), 0, -1):
        if H % d == 0 and (d % 8 == 0 or d == H):
            return d
    return H


def convblock_forward_nhwc(x_nhwc, w_oihw, bias, gamma, beta, *,
                           tile_h=128, mxu_dtype=jnp.bfloat16):
    """ConvBlock.forward (upsample=False, stride=1, k=3) on an NHWC activation."""
    N, H, W, Cin = x_nhwc.shape
    Cout = w_oihw.shape[0]
    assert w_oihw.shape[1] == Cin and w_oihw.shape[2] == K and w_oihw.shape[3] == K
    assert H >= 2 and W >= 2, "ReflectionPad2d(1) needs H, W >= 2"

    TH = _pick_tile_h(H, tile_h)
    x_nhwc = x_nhwc.astype(jnp.float32)

    # ---- BatchNorm2d training-mode batch stats (biased var), folded to scale/shift ----
    mean = jnp.mean(x_nhwc, axis=(0, 1, 2))
    var = jnp.mean(jnp.square(x_nhwc - mean), axis=(0, 1, 2))
    scale = gamma.astype(jnp.float32) * jax.lax.rsqrt(var + EPS)           # (Cin,)
    shift = beta.astype(jnp.float32) - mean * scale                        # (Cin,)

    # ---- lane-flatten (W, Cin) -> free reshape, no padding pass over HBM ----
    x_flat = x_nhwc.reshape(N, H, W * Cin)

    # ---- banded weights with the W-axis reflection folded in --------------------------
    # band[kh, w_in*Cin+ci, w_out*Cout+co] = sum_kw [refl(w_out+kw) == w_in] * W[co,ci,kh,kw]
    wp = np.arange(W + 2 * PAD) - PAD                 # padded position -> signed index
    refl = np.abs(wp)
    refl = np.where(refl >= W, 2 * (W - 1) - refl, refl)   # reflect at the far edge
    S = np.zeros((K, W, W), np.float32)               # (kw, w_in, w_out)
    for kw in range(K):
        for w_out in range(W):
            S[kw, refl[w_out + kw], w_out] = 1.0

    w_kkio = jnp.transpose(w_oihw, (2, 3, 1, 0)).astype(jnp.float32)       # (kh, kw, ci, co)
    w_band = jnp.einsum('xwv,kxio->kwivo', S, w_kkio)                      # (kh,w_in,ci,w_out,co)
    w_band = w_band.reshape(K, W * Cin, W * Cout).astype(mxu_dtype)

    scale_flat = jnp.tile(scale, W).reshape(1, W * Cin)
    shift_flat = jnp.tile(shift, W).reshape(1, W * Cin)
    bias_flat = jnp.tile(bias.astype(jnp.float32), W).reshape(1, W * Cout)

    # ---- VMEM budget derived from actual buffer sizes (double-buffered blocks) --------
    w_item = jnp.dtype(mxu_dtype).itemsize
    vmem_bytes = (
        2 * H * W * Cin * 4 +                       # per-image input block
        2 * K * W * Cin * W * Cout * w_item +       # banded weights
        2 * TH * W * Cout * 4 +                     # output tile
        2 * (W * Cout + 2 * W * Cin) * 4 +          # bias / scale / shift
        (TH + 2) * W * Cin * 4                      # xs scratch
    )
    vmem_limit = int(min(max(2 * vmem_bytes, 4 << 20), 48 << 20))   # v7x-safe cap

    out_flat = pl.pallas_call(
        convblock_kernel,
        out_shape=jax.ShapeDtypeStruct((N, H, W * Cout), jnp.float32),
        grid=(N, H // TH),
        in_specs=[
            pl.BlockSpec((1, H, W * Cin), lambda n, h: (n, 0, 0)),          # per-image input
            pl.BlockSpec((K, W * Cin, W * Cout), lambda n, h: (0, 0, 0)),   # banded weights
            pl.BlockSpec((1, W * Cout), lambda n, h: (0, 0)),               # bias
            pl.BlockSpec((1, W * Cin), lambda n, h: (0, 0)),                # scale
            pl.BlockSpec((1, W * Cin), lambda n, h: (0, 0)),                # shift
        ],
        out_specs=pl.BlockSpec((1, TH, W * Cout), lambda n, h: (n, h, 0)),
        scratch_shapes=[pltpu.VMEM((TH + 2 * PAD, W * Cin), jnp.float32)],
        compiler_params=pltpu.CompilerParams(
            dimension_semantics=("parallel", "parallel"),   # no cross-step state
            vmem_limit_bytes=vmem_limit,
        ),
    )(x_flat, w_band, bias_flat, scale_flat, shift_flat)

    return out_flat.reshape(N, H, W, Cout)                  # free reshape


def convblock_forward(x_nchw, w_oihw, bias, gamma, beta, **kwargs):
    """NCHW wrapper for PyTorch-layout parity.

    TODO(synk): keep the surrounding model NHWC and call convblock_forward_nhwc directly to
    drop these two full-array HBM transpose passes.
    """
    x_nhwc = jnp.transpose(x_nchw, (0, 2, 3, 1))
    out_nhwc = convblock_forward_nhwc(x_nhwc, w_oihw, bias, gamma, beta, **kwargs)
    return jnp.transpose(out_nhwc, (0, 3, 1, 2))


def convblock_reference(x_nchw, w_oihw, bias, gamma, beta):
    """Pure-JAX reference matching PyTorch ConvBlock.forward (training-mode BN)."""
    mean = jnp.mean(x_nchw, axis=(0, 2, 3), keepdims=True)
    var = jnp.mean(jnp.square(x_nchw - mean), axis=(0, 2, 3), keepdims=True)
    xn = (x_nchw - mean) * jax.lax.rsqrt(var + EPS)
    xn = xn * gamma.reshape(1, -1, 1, 1) + beta.reshape(1, -1, 1, 1)
    xn = jnp.maximum(xn, 0.0)
    xp = jnp.pad(xn, ((0, 0), (0, 0), (PAD, PAD), (PAD, PAD)), mode="reflect")
    out = jax.lax.conv_general_dilated(
        xp, w_oihw, window_strides=(1, 1), padding="VALID",
        dimension_numbers=("NCHW", "OIHW", "NCHW"))
    return out + bias.reshape(1, -1, 1, 1)


if __name__ == "__main__":
    key = jax.random.PRNGKey(0)
    k_x, k_w = jax.random.split(key)

    N, Cin, H, W = 2, 4, 16, 16
    Cout = 8

    x = jax.random.normal(k_x, (N, Cin, H, W), dtype=jnp.float32)

    # Conv2d params: kaiming_normal_ weight (fan_in = Cin*K*K, gain=sqrt(2)), bias=0.1
    fan_in = Cin * K * K
    w = jax.random.normal(k_w, (Cout, Cin, K, K), dtype=jnp.float32) * np.sqrt(2.0 / fan_in)
    b = jnp.full((Cout,), 0.1, dtype=jnp.float32)

    # BatchNorm2d params (PyTorch defaults): gamma=1, beta=0
    gamma = jnp.ones((Cin,), dtype=jnp.float32)
    beta = jnp.zeros((Cin,), dtype=jnp.float32)

    ref = jax.block_until_ready(convblock_reference(x, w, b, gamma, beta))

    # Default path: bf16 operands into the MXU (f32 accumulation) — v6e/v7x throughput win.
    fwd_bf16 = jax.jit(functools.partial(convblock_forward, mxu_dtype=jnp.bfloat16))
    out_bf16 = jax.block_until_ready(fwd_bf16(x, w, b, gamma, beta))
    np.testing.assert_allclose(np.asarray(out_bf16), np.asarray(ref), rtol=3e-2, atol=3e-2)

    # Strict-parity path: f32 MXU operands.
    fwd_f32 = jax.jit(functools.partial(convblock_forward, mxu_dtype=jnp.float32))
    out_f32 = jax.block_until_ready(fwd_f32(x, w, b, gamma, beta))
    np.testing.assert_allclose(np.asarray(out_f32), np.asarray(ref), rtol=1e-4, atol=1e-4)

    print("KERNEL_OK")
</pallas_src>

<mosaic_0001>
module attributes {stable_mosaic.version = 11 : i64} {
  func.func @convblock_kernel(%arg0: i32, %arg1: i32, %arg2: memref<1x16x64xf32, #tpu.memory_space<vmem>>, %arg3: memref<3x64x128xbf16, #tpu.memory_space<vmem>>, %arg4: memref<1x128xf32, #tpu.memory_space<vmem>>, %arg5: memref<1x64xf32, #tpu.memory_space<vmem>>, %arg6: memref<1x64xf32, #tpu.memory_space<vmem>>, %arg7: memref<1x16x128xf32, #tpu.memory_space<vmem>>, %arg8: memref<18x64xf32, #tpu.memory_space<vmem>>) attributes {dimension_semantics = [#tpu.dimension_semantics<parallel>, #tpu.dimension_semantics<parallel>], iteration_bounds = array<i64: 2, 1>, scalar_prefetch = 0 : i64, scratch_operands = 1 : i64, tpu.core_type = #tpu.core_type<tc>, window_params = [{transform_indices = @transform_0, window_bounds = array<i64: 1, 16, 64>}, {pipeline_mode = #tpu.pipeline_mode<synchronous>, transform_indices = @transform_1, window_bounds = array<i64: 3, 64, 128>}, {pipeline_mode = #tpu.pipeline_mode<synchronous>, transform_indices = @transform_2, window_bounds = array<i64: 1, 128>}, {pipeline_mode = #tpu.pipeline_mode<synchronous>, transform_indices = @transform_3, window_bounds = array<i64: 1, 64>}, {pipeline_mode = #tpu.pipeline_mode<synchronous>, transform_indices = @transform_4, window_bounds = array<i64: 1, 64>}, {transform_indices = @transform_5, window_bounds = array<i64: 1, 16, 128>}]} {
    %c16_i32 = arith.constant 16 : i32
    %0 = arith.muli %arg1, %c16_i32 : i32
    %1 = tpu.assume_multiple %0, 16 : i32
    %c0 = arith.constant 0 : index
    %c0_0 = arith.constant 0 : index
    %2 = vector.load %arg5[%c0, %c0_0] : memref<1x64xf32, #tpu.memory_space<vmem>>, vector<1x64xf32>
    %c0_1 = arith.constant 0 : index
    %c0_2 = arith.constant 0 : index
    %3 = vector.load %arg6[%c0_1, %c0_2] : memref<1x64xf32, #tpu.memory_space<vmem>>, vector<1x64xf32>
    %c0_i32 = arith.constant 0 : i32
    %4 = arith.cmpi eq, %1, %c0_i32 : i32
    %c1_i32 = arith.constant 1 : i32
    %5 = arith.subi %1, %c1_i32 : i32
    %c1_i32_3 = arith.constant 1 : i32
    %6 = arith.select %4, %c1_i32_3, %5 : i32
    %c16_i32_4 = arith.constant 16 : i32
    %7 = arith.addi %1, %c16_i32_4 : i32
    %c16_i32_5 = arith.constant 16 : i32
    %8 = arith.cmpi eq, %7, %c16_i32_5 : i32
    %c16_i32_6 = arith.constant 16 : i32
    %9 = arith.addi %1, %c16_i32_6 : i32
    %c14_i32 = arith.constant 14 : i32
    %10 = arith.select %8, %c14_i32, %9 : i32
    %c0_7 = arith.constant 0 : index
    %11 = arith.index_cast %6 : i32 to index
    %c0_8 = arith.constant 0 : index
    %12 = vector.load %arg2[%c0_7, %11, %c0_8] : memref<1x16x64xf32, #tpu.memory_space<vmem>>, vector<1x1x64xf32>
    %13 = vector.shape_cast %12 : vector<1x1x64xf32> to vector<1x64xf32>
    %14 = arith.mulf %13, %2 : vector<1x64xf32>
    %15 = arith.addf %14, %3 : vector<1x64xf32>
    %cst = arith.constant 0.000000e+00 : f32
    %16 = vector.broadcast %cst : f32 to vector<1x64xf32>
    %17 = arith.maximumf %15, %16 : vector<1x64xf32>
    %c0_9 = arith.constant 0 : index
    %c0_10 = arith.constant 0 : index
    %18 = vector.load %arg8[%c0_9, %c0_10] : memref<18x64xf32, #tpu.memory_space<vmem>>, vector<1x64xf32>
    tpu.vector_store %arg8[%c0_9, %c0_10], %17 {strides = array<i32>} : memref<18x64xf32, #tpu.memory_space<vmem>>, vector<1x64xf32>,
    %c0_11 = arith.constant 0 : index
    %19 = arith.index_cast %1 : i32 to index
    %c0_12 = arith.constant 0 : index
    %20 = vector.load %arg2[%c0_11, %19, %c0_12] : memref<1x16x64xf32, #tpu.memory_space<vmem>>, vector<1x16x64xf32>
    %21 = vector.shape_cast %20 : vector<1x16x64xf32> to vector<16x64xf32>
    %22 = vector.broadcast %2 : vector<1x64xf32> to vector<16x64xf32>
    %23 = arith.mulf %21, %22 : vector<16x64xf32>
    %24 = vector.broadcast %3 : vector<1x64xf32> to vector<16x64xf32>
    %25 = arith.addf %23, %24 : vector<16x64xf32>
    %cst_13 = arith.constant 0.000000e+00 : f32
    %26 = vector.broadcast %cst_13 : f32 to vector<16x64xf32>
    %27 = arith.maximumf %25, %26 : vector<16x64xf32>
    %c1 = arith.constant 1 : index
    %c0_14 = arith.constant 0 : index
    %28 = vector.load %arg8[%c1, %c0_14] : memref<18x64xf32, #tpu.memory_space<vmem>>, vector<16x64xf32>
    tpu.vector_store %arg8[%c1, %c0_14], %27 {strides = array<i32>} : memref<18x64xf32, #tpu.memory_space<vmem>>, vector<16x64xf32>,
    %c0_15 = arith.constant 0 : index
    %29 = arith.index_cast %10 : i32 to index
    %c0_16 = arith.constant 0 : index
    %30 = vector.load %arg2[%c0_15, %29, %c0_16] : memref<1x16x64xf32, #tpu.memory_space<vmem>>, vector<1x1x64xf32>
    %31 = vector.shape_cast %30 : vector<1x1x64xf32> to vector<1x64xf32>
    %32 = arith.mulf %31, %2 : vector<1x64xf32>
    %33 = arith.addf %32, %3 : vector<1x64xf32>
    %cst_17 = arith.constant 0.000000e+00 : f32
    %34 = vector.broadcast %cst_17 : f32 to vector<1x64xf32>
    %35 = arith.maximumf %33, %34 : vector<1x64xf32>
    %c17 = arith.constant 17 : index
    %c0_18 = arith.constant 0 : index
    %36 = vector.load %arg8[%c17, %c0_18] : memref<18x64xf32, #tpu.memory_space<vmem>>, vector<1x64xf32>
    tpu.vector_store %arg8[%c17, %c0_18], %35 {strides = array<i32>} : memref<18x64xf32, #tpu.memory_space<vmem>>, vector<1x64xf32>,
    %c0_19 = arith.constant 0 : index
    %c0_20 = arith.constant 0 : index
    %37 = vector.load %arg4[%c0_19, %c0_20] : memref<1x128xf32, #tpu.memory_space<vmem>>, vector<1x128xf32>
    %38 = vector.shape_cast %37 : vector<1x128xf32> to vector<1x128xf32>
    %39 = vector.broadcast %38 : vector<1x128xf32> to vector<16x128xf32>
    %c0_21 = arith.constant 0 : index
    %c0_22 = arith.constant 0 : index
    %40 = vector.load %arg8[%c0_21, %c0_22] : memref<18x64xf32, #tpu.memory_space<vmem>>, vector<16x64xf32>
    %41 = arith.truncf %40 : vector<16x64xf32> to vector<16x64xbf16>
    %c0_23 = arith.constant 0 : index
    %c0_24 = arith.constant 0 : index
    %c0_25 = arith.constant 0 : index
    %42 = vector.load %arg3[%c0_23, %c0_24, %c0_25] : memref<3x64x128xbf16, #tpu.memory_space<vmem>>, vector<1x64x128xbf16>
    %43 = vector.shape_cast %42 : vector<1x64x128xbf16> to vector<64x128xbf16>
    %cst_26 = arith.constant dense<0.000000e+00> : vector<16x128xf32>
    %44 = tpu.matmul %41, %43, %cst_26 {dimension_numbers = #tpu.dot_dimension_numbers<[1], [0], [0], [1], [0, 0, 1, 1], [], []>} : vector<16x64xbf16>, vector<64x128xbf16>, vector<16x128xf32> -> vector<16x128xf32>
    %45 = arith.addf %39, %44 : vector<16x128xf32>
    %c1_27 = arith.constant 1 : index
    %c0_28 = arith.constant 0 : index
    %46 = vector.load %arg8[%c1_27, %c0_28] : memref<18x64xf32, #tpu.memory_space<vmem>>, vector<16x64xf32>
    %47 = arith.truncf %46 : vector<16x64xf32> to vector<16x64xbf16>
    %c1_29 = arith.constant 1 : index
    %c0_30 = arith.constant 0 : index
    %c0_31 = arith.constant 0 : index
    %48 = vector.load %arg3[%c1_29, %c0_30, %c0_31] : memref<3x64x128xbf16, #tpu.memory_space<vmem>>, vector<1x64x128xbf16>
    %49 = vector.shape_cast %48 : vector<1x64x128xbf16> to vector<64x128xbf16>
    %cst_32 = arith.constant dense<0.000000e+00> : vector<16x128xf32>
    %50 = tpu.matmul %47, %49, %cst_32 {dimension_numbers = #tpu.dot_dimension_numbers<[1], [0], [0], [1], [0, 0, 1, 1], [], []>} : vector<16x64xbf16>, vector<64x128xbf16>, vector<16x128xf32> -> vector<16x128xf32>
    %51 = arith.addf %45, %50 : vector<16x128xf32>
    %c2 = arith.constant 2 : index
    %c0_33 = arith.constant 0 : index
    %52 = vector.load %arg8[%c2, %c0_33] : memref<18x64xf32, #tpu.memory_space<vmem>>, vector<16x64xf32>
    %53 = arith.truncf %52 : vector<16x64xf32> to vector<16x64xbf16>
    %c2_34 = arith.constant 2 : index
    %c0_35 = arith.constant 0 : index
    %c0_36 = arith.constant 0 : index
    %54 = vector.load %arg3[%c2_34, %c0_35, %c0_36] : memref<3x64x128xbf16, #tpu.memory_space<vmem>>, vector<1x64x128xbf16>
    %55 = vector.shape_cast %54 : vector<1x64x128xbf16> to vector<64x128xbf16>
    %cst_37 = arith.constant dense<0.000000e+00> : vector<16x128xf32>
    %56 = tpu.matmul %53, %55, %cst_37 {dimension_numbers = #tpu.dot_dimension_numbers<[1], [0], [0], [1], [0, 0, 1, 1], [], []>} : vector<16x64xbf16>, vector<64x128xbf16>, vector<16x128xf32> -> vector<16x128xf32>
    %57 = arith.addf %51, %56 : vector<16x128xf32>
    %c0_38 = arith.constant 0 : index
    %c0_39 = arith.constant 0 : index
    %c0_40 = arith.constant 0 : index
    %58 = vector.load %arg7[%c0_38, %c0_39, %c0_40] : memref<1x16x128xf32, #tpu.memory_space<vmem>>, vector<1x16x128xf32>
    %59 = vector.shape_cast %58 : vector<1x16x128xf32> to vector<16x128xf32>
    %60 = vector.shape_cast %57 : vector<16x128xf32> to vector<1x16x128xf32>
    tpu.vector_store %arg7[%c0_38, %c0_39, %c0_40], %60 {strides = array<i32>} : memref<1x16x128xf32, #tpu.memory_space<vmem>>, vector<1x16x128xf32>,
    return
  }
  func.func @transform_0(%arg0: i32, %arg1: i32) -> (i32, i32, i32) {
    %c0_i32 = arith.constant 0 : i32
    %c0_i32_0 = arith.constant 0 : i32
    %c0_i32_1 = arith.constant 0 : i32
    return %arg0, %c0_i32, %c0_i32_0 : i32, i32, i32
  }
  func.func @transform_1(%arg0: i32, %arg1: i32) -> (i32, i32, i32) {
    %c0_i32 = arith.constant 0 : i32
    %c0_i32_0 = arith.constant 0 : i32
    %c0_i32_1 = arith.constant 0 : i32
    %c0_i32_2 = arith.constant 0 : i32
    return %c0_i32, %c0_i32_0, %c0_i32_1 : i32, i32, i32
  }
  func.func @transform_2(%arg0: i32, %arg1: i32) -> (i32, i32) {
    %c0_i32 = arith.constant 0 : i32
    %c0_i32_0 = arith.constant 0 : i32
    %c0_i32_1 = arith.constant 0 : i32
    return %c0_i32, %c0_i32_0 : i32, i32
  }
  func.func @transform_3(%arg0: i32, %arg1: i32) -> (i32, i32) {
    %c0_i32 = arith.constant 0 : i32
    %c0_i32_0 = arith.constant 0 : i32
    %c0_i32_1 = arith.constant 0 : i32
    return %c0_i32, %c0_i32_0 : i32, i32
  }
  func.func @transform_4(%arg0: i32, %arg1: i32) -> (i32, i32) {
    %c0_i32 = arith.constant 0 : i32
    %c0_i32_0 = arith.constant 0 : i32
    %c0_i32_1 = arith.constant 0 : i32
    return %c0_i32, %c0_i32_0 : i32, i32
  }
  func.func @transform_5(%arg0: i32, %arg1: i32) -> (i32, i32, i32) {
    %c0_i32 = arith.constant 0 : i32
    %c0_i32_0 = arith.constant 0 : i32
    return %arg0, %arg1, %c0_i32 : i32, i32, i32
  }
}

</mosaic_0001>

<llo_original>
// kernel: tile.18
$region0: #{tile.18}
  #allocation0 [shape = 's32[1]{0}', space=sflag, size = 0x4, scoped, tag = 'scoped memory for tile.18']
  %s0 = inlined_call_operand.vmem [shape: f32[4], index: 0, kind: input, shape index: {}]
  %s1 = inlined_call_operand.vmem [shape: f32[16,4], index: 1, kind: output, shape index: {}]
  // Predicated region
  $region2: #{tile.18} parent=0 // pred_check
    _
  $region3: #{tile.18} parent=0 // pred_check_branch
    %3 = sbr.rel (0) target = $region5
  $region4: #{tile.18} parent=0 // pred_region
    _
  $region5: #{tile.18} parent=0 // pred_fallthru
    _
  %v4 = vld [vmem:[%s0] ss:$0 sm:$0xff]
  %5 = vst [vmem:[%s1] sm:$0xff] %v4
  %s6 = scalar_lea.vmem %s1, 8
  %7 = vst [vmem:[%s6] sm:$0xff] %v4

// kernel: tile.19
$region0: #{tile.19}
  %s0 = inlined_call_operand.vmem [shape: f32[16,4], index: 0, kind: input, shape index: {}]
  %s1 = inlined_call_operand.vmem [shape: f32[1,64], index: 1, kind: output, shape index: {}]
  $region1: #{tile.19} parent=0
    #allocation0 [shape = 'u8[4096]{0}', space=vmem, size = 0x1000, scoped, tag = 'scoped mem for output reshape']
    %v2 = vld [vmem:[%s0] sm:$0x1]
    %vm3 = vcmask 31744
    %4 = vst.msk [vmem:[#allocation0] sm:$0x1] %vm3, %v2
    %s5 = scalar_lea.vmem %s0, 15
    %v6 = vld [vmem:[%s5] sm:$0x1]
    %7 = vrot.lane.b32.xlu0 %v6, 60
    %v8 = vpop.permute.xlu0 %7
    %vm9 = vcmask 523744
    %10 = vst.msk [vmem:[#allocation0] sm:$0x1] %vm9, %v8
    %s11 = scalar_lea.vmem %s0, 14
    %v12 = vld [vmem:[%s11] sm:$0x1]
    %13 = vrot.lane.b32.xlu0 %v12, 56
    %v14 = vpop.permute.xlu0 %13
    %vm15 = vcmask 490944
    %16 = vst.msk [vmem:[#allocation0] sm:$0x1] %vm15, %v14
    %s17 = scalar_lea.vmem %s0, 13
    %v18 = vld [vmem:[%s17] sm:$0x1]
    %19 = vrot.lane.b32.xlu0 %v18, 52
    %v20 = vpop.permute.xlu0 %19
    %vm21 = vcmask 458144
    %22 = vst.msk [vmem:[#allocation0] sm:$0x1] %vm21, %v20
    %s23 = scalar_lea.vmem %s0, 12
    %v24 = vld [vmem:[%s23] sm:$0x1]
    %25 = vrot.lane.b32.xlu0 %v24, 48
    %v26 = vpop.permute.xlu0 %25
    %vm27 = vcmask 425344
    %28 = vst.msk [vmem:[#allocation0] sm:$0x1] %vm27, %v26
    %s29 = scalar_lea.vmem %s0, 11
    %v30 = vld [vmem:[%s29] sm:$0x1]
    %31 = vrot.lane.b32.xlu0 %v30, 44
    %v32 = vpop.permute.xlu0 %31
    %vm33 = vcmask 392544
    %34 = vst.msk [vmem:[#allocation0] sm:$0x1] %vm33, %v32
    %s35 = scalar_lea.vmem %s0, 10
    %v36 = vld [vmem:[%s35] sm:$0x1]
    %37 = vrot.lane.b32.xlu0 %v36, 40
    %v38 = vpop.permute.xlu0 %37
    %vm39 = vcmask 359744
    %40 = vst.msk [vmem:[#allocation0] sm:$0x1] %vm39, %v38
    %s41 = scalar_lea.vmem %s0, 9
    %v42 = vld [vmem:[%s41] sm:$0x1]
    %43 = vrot.lane.b32.xlu0 %v42, 36
    %v44 = vpop.permute.xlu0 %43
    %vm45 = vcmask 326944
    %46 = vst.msk [vmem:[#allocation0] sm:$0x1] %vm45, %v44
    %s47 = scalar_lea.vmem %s0, 8
    %v48 = vld [vmem:[%s47] sm:$0x1]
    %49 = vrot.lane.b32.xlu0 %v48, 32
    %v50 = vpop.permute.xlu0 %49
    %vm51 = vcmask 294144
    %52 = vst.msk [vmem:[#allocation0] sm:$0x1] %vm51, %v50
    %s53 = scalar_lea.vmem %s0, 7
    %v54 = vld [vmem:[%s53] sm:$0x1]
    %55 = vrot.lane.b32.xlu0 %v54, 28
    %v56 = vpop.permute.xlu0 %55
    %vm57 = vcmask 261344
    %58 = vst.msk [vmem:[#allocation0] sm:$0x1] %vm57, %v56
    %s59 = scalar_lea.vmem %s0, 6
    %v60 = vld [vmem:[%s59] sm:$0x1]
    %61 = vrot.lane.b32.xlu0 %v60, 24
    %v62 = vpop.permute.xlu0 %61
    %vm63 = vcmask 228544
    %64 = vst.msk [vmem:[#allocation0] sm:$0x1] %vm63, %v62
    %s65 = scalar_lea.vmem %s0, 5
    %v66 = vld [vmem:[%s65] sm:$0x1]
    %67 = vrot.lane.b32.xlu0 %v66, 20
    %v68 = vpop.permute.xlu0 %67
    %vm69 = vcmask 195744
    %70 = vst.msk [vmem:[#allocation0] sm:$0x1] %vm69, %v68
    %s71 = scalar_lea.vmem %s0, 4
    %v72 = vld [vmem:[%s71] sm:$0x1]
    %73 = vrot.lane.b32.xlu0 %v72, 16
    %v74 = vpop.permute.xlu0 %73
    %vm75 = vcmask 162944
    %76 = vst.msk [vmem:[#allocation0] sm:$0x1] %vm75, %v74
    %s77 = scalar_lea.vmem %s0, 3
    %v78 = vld [vmem:[%s77] sm:$0x1]
    %79 = vrot.lane.b32.xlu0 %v78, 12
    %v80 = vpop.permute.xlu0 %79
    %vm81 = vcmask 130144
    %82 = vst.msk [vmem:[#allocation0] sm:$0x1] %vm81, %v80
    %s83 = scalar_lea.vmem %s0, 2
    %v84 = vld [vmem:[%s83] sm:$0x1]
    %85 = vrot.lane.b32.xlu0 %v84, 8
    %v86 = vpop.permute.xlu0 %85
    %vm87 = vcmask 97344
    %88 = vst.msk [vmem:[#allocation0] sm:$0x1] %vm87, %v86
    %s89 = scalar_lea.vmem %s0, 1
    %v90 = vld [vmem:[%s89] sm:$0x1]
    %91 = vrot.lane.b32.xlu0 %v90, 4
    %v92 = vpop.permute.xlu0 %91
    %vm93 = vcmask 64544
    %94 = vst.msk [vmem:[#allocation0] sm:$0x1] %vm93, %v92
    %s96 = ssub.s32 2, 1
    %v97 = vld [vmem:[#allocation0] sm:%s96]
    %s99 = ssub.s32 2, 1
    %100 = vst [vmem:[%s1] sm:%s99] %v97

// kernel: tile.28
$region0: #{tile.28}
  #allocation0 [shape = 's32[1]{0}', space=sflag, size = 0x4, scoped, tag = 'scoped memory for tile.28']
  %s0 = inlined_call_operand.vmem [shape: f32[8], index: 0, kind: input, shape index: {}]
  %s1 = inlined_call_operand.vmem [shape: f32[16,8], index: 1, kind: output, shape index: {}]
  // Predicated region
  $region2: #{tile.28} parent=0 // pred_check
    _
  $region3: #{tile.28} parent=0 // pred_check_branch
    %3 = sbr.rel (0) target = $region5
  $region4: #{tile.28} parent=0 // pred_region
    _
  $region5: #{tile.28} parent=0 // pred_fallthru
    _
  %v4 = vld [vmem:[%s0] ss:$0 sm:$0xff]
  %5 = vst [vmem:[%s1] sm:$0xff] %v4
  %s6 = scalar_lea.vmem %s1, 8
  %7 = vst [vmem:[%s6] sm:$0xff] %v4

// kernel: tile.29
$region0: #{tile.29}
  %s0 = inlined_call_operand.vmem [shape: f32[16,8], index: 0, kind: input, shape index: {}]
  %s1 = inlined_call_operand.vmem [shape: f32[1,128], index: 1, kind: output, shape index: {}]
  $region1: #{tile.29} parent=0
    #allocation0 [shape = 'u8[4096]{0}', space=vmem, size = 0x1000, scoped, tag = 'scoped mem for output reshape']
    %v2 = vld [vmem:[%s0] sm:$0x1]
    %vm3 = vcmask 64512
    %4 = vst.msk [vmem:[#allocation0] sm:$0x1] %vm3, %v2
    %s5 = scalar_lea.vmem %s0, 15
    %v6 = vld [vmem:[%s5] sm:$0x1]
    %7 = vrot.lane.b32.xlu0 %v6, 120
    %v8 = vpop.permute.xlu0 %7
    %vm9 = vcmask 1048512
    %10 = vst.msk [vmem:[#allocation0] sm:$0x1] %vm9, %v8
    %s11 = scalar_lea.vmem %s0, 14
    %v12 = vld [vmem:[%s11] sm:$0x1]
    %13 = vrot.lane.b32.xlu0 %v12, 112
    %v14 = vpop.permute.xlu0 %13
    %vm15 = vcmask 982912
    %16 = vst.msk [vmem:[#allocation0] sm:$0x1] %vm15, %v14
    %s17 = scalar_lea.vmem %s0, 13
    %v18 = vld [vmem:[%s17] sm:$0x1]
    %19 = vrot.lane.b32.xlu0 %v18, 104
    %v20 = vpop.permute.xlu0 %19
    %vm21 = vcmask 917312
    %22 = vst.msk [vmem:[#allocation0] sm:$0x1] %vm21, %v20
    %s23 = scalar_lea.vmem %s0, 12
    %v24 = vld [vmem:[%s23] sm:$0x1]
    %25 = vrot.lane.b32.xlu0 %v24, 96
    %v26 = vpop.permute.xlu0 %25
    %vm27 = vcmask 851712
    %28 = vst.msk [vmem:[#allocation0] sm:$0x1] %vm27, %v26
    %s29 = scalar_lea.vmem %s0, 11
    %v30 = vld [vmem:[%s29] sm:$0x1]
    %31 = vrot.lane.b32.xlu0 %v30, 88
    %v32 = vpop.permute.xlu0 %31
    %vm33 = vcmask 786112
    %34 = vst.msk [vmem:[#allocation0] sm:$0x1] %vm33, %v32
    %s35 = scalar_lea.vmem %s0, 10
    %v36 = vld [vmem:[%s35] sm:$0x1]
    %37 = vrot.lane.b32.xlu0 %v36, 80
    %v38 = vpop.permute.xlu0 %37
    %vm39 = vcmask 720512
    %40 = vst.msk [vmem:[#allocation0] sm:$0x1] %vm39, %v38
    %s41 = scalar_lea.vmem %s0, 9
    %v42 = vld [vmem:[%s41] sm:$0x1]
    %43 = vrot.lane.b32.xlu0 %v42, 72
    %v44 = vpop.permute.xlu0 %43
    %vm45 = vcmask 654912
    %46 = vst.msk [vmem:[#allocation0] sm:$0x1] %vm45, %v44
    %s47 = scalar_lea.vmem %s0, 8
    %v48 = vld [vmem:[%s47] sm:$0x1]
    %49 = vrot.lane.b32.xlu0 %v48, 64
    %v50 = vpop.permute.xlu0 %49
    %vm51 = vcmask 589312
    %52 = vst.msk [vmem:[#allocation0] sm:$0x1] %vm51, %v50
    %s53 = scalar_lea.vmem %s0, 7
    %v54 = vld [vmem:[%s53] sm:$0x1]
    %55 = vrot.lane.b32.xlu0 %v54, 56
    %v56 = vpop.permute.xlu0 %55
    %vm57 = vcmask 523712
    %58 = vst.msk [vmem:[#allocation0] sm:$0x1] %vm57, %v56
    %s59 = scalar_lea.vmem %s0, 6
    %v60 = vld [vmem:[%s59] sm:$0x1]
    %61 = vrot.lane.b32.xlu0 %v60, 48
    %v62 = vpop.permute.xlu0 %61
    %vm63 = vcmask 458112
    %64 = vst.msk [vmem:[#allocation0] sm:$0x1] %vm63, %v62
    %s65 = scalar_lea.vmem %s0, 5
    %v66 = vld [vmem:[%s65] sm:$0x1]
    %67 = vrot.lane.b32.xlu0 %v66, 40
    %v68 = vpop.permute.xlu0 %67
    %vm69 = vcmask 392512
    %70 = vst.msk [vmem:[#allocation0] sm:$0x1] %vm69, %v68
    %s71 = scalar_lea.vmem %s0, 4
    %v72 = vld [vmem:[%s71] sm:$0x1]
    %73 = vrot.lane.b32.xlu0 %v72, 32
    %v74 = vpop.permute.xlu0 %73
    %vm75 = vcmask 326912
    %76 = vst.msk [vmem:[#allocation0] sm:$0x1] %vm75, %v74
    %s77 = scalar_lea.vmem %s0, 3
    %v78 = vld [vmem:[%s77] sm:$0x1]
    %79 = vrot.lane.b32.xlu0 %v78, 24
    %v80 = vpop.permute.xlu0 %79
    %vm81 = vcmask 261312
    %82 = vst.msk [vmem:[#allocation0] sm:$0x1] %vm81, %v80
    %s83 = scalar_lea.vmem %s0, 2
    %v84 = vld [vmem:[%s83] sm:$0x1]
    %85 = vrot.lane.b32.xlu0 %v84, 16
    %v86 = vpop.permute.xlu0 %85
    %vm87 = vcmask 195712
    %88 = vst.msk [vmem:[#allocation0] sm:$0x1] %vm87, %v86
    %s89 = scalar_lea.vmem %s0, 1
    %v90 = vld [vmem:[%s89] sm:$0x1]
    %91 = vrot.lane.b32.xlu0 %v90, 8
    %v92 = vpop.permute.xlu0 %91
    %vm93 = vcmask 130112
    %94 = vst.msk [vmem:[#allocation0] sm:$0x1] %vm93, %v92
    %s96 = ssub.s32 2, 1
    %v97 = vld [vmem:[#allocation0] sm:%s96]
    %s99 = ssub.s32 2, 1
    %100 = vst [vmem:[%s1] sm:%s99] %v97

// kernel: convblock_forward.1
$region0: #{convblock_forward.1}
  #allocation0 [shape = 'u32[]', space=smem, size = 0x4, offset = 0x4, fixed_abs, tag = 'smem constant byte address 0x4 - core index']
  #allocation1 [shape = 'u32[72,128]{1,0:T(1,128)}', space=vmem, size = 0x9000, scoped, tag = 'internal scratch']
  #allocation2 [shape = 'f32[18,64]{1,0:T(8,128)}', space=vmem, size = 0x3000, scoped, tag = 'scratch operand']
  %s0 = inlined_call_operand.vmem [shape: f32[2,16,64], index: 0, kind: input, shape index: {}]
  %s1 = inlined_call_operand.vmem [shape: bf16[3,64,128], index: 1, kind: input, shape index: {}]
  %s2 = inlined_call_operand.vmem [shape: f32[1,128], index: 2, kind: input, shape index: {}]
  %s3 = inlined_call_operand.vmem [shape: f32[1,64], index: 3, kind: input, shape index: {}]
  %s4 = inlined_call_operand.vmem [shape: f32[1,64], index: 4, kind: input, shape index: {}]
  %s5 = inlined_call_operand.vmem [shape: f32[2,16,128], index: 5, kind: output, shape index: {}]
  %s6 = sld [smem:[#allocation0]]
  $region53: #{convblock_forward.1} parent=0
    _
  %s8 = ssub.s32 1, %s6
  %s9 = scalar_select 0, %s8, %s6
  loop: start=0, step=1, limit=4
  $region2: #{convblock_forward.1} parent=0 // loop_pre_header
    _
  $region3: #{convblock_forward.1} parent=0 // loop_header
    %s11 = sphi 0, %s15
    %p12 = scmp.ge.s32.totalorder %s11, 4
    %s18 = sphi 0, %s30
    %s19 = sphi 0, %s26
    %s20 = sphi 0, %s18
    %s21 = sphi 0, %s19
    %s22 = sphi 0, %s20
    %s23 = sphi 0, %s21
    %s33 = sphi 0, %s35
    %s36 = sphi 0, %s33
    %s37 = sphi 0, %s36
    %s53 = sphi 0, %s37
    %s57 = sphi 0, %s57
    %s59 = sphi 0, %s57
    %s60 = sphi 0, %s59
    %s74 = sphi 0, %s60
    %s78 = sphi 0, %s78
    %s80 = sphi 0, %s78
    %s81 = sphi 0, %s80
    %s95 = sphi 0, %s81
    %s99 = sphi 0, %s99
    %s101 = sphi 0, %s99
    %s102 = sphi 0, %s101
    %s116 = sphi 0, %s102
    %s120 = sphi 0, %s120
    %s122 = sphi 0, %s120
    %s123 = sphi 0, %s122
    %s137 = sphi 0, %s123
    %s145 = sphi 0, %s147
    %s148 = sphi 0, %s145
    %s149 = sphi 0, %s148
    %s165 = sphi 0, %s149
  $region4: #{convblock_forward.1} parent=0 // loop_header_branch
    %14 = sbr.rel (%p12) target = $region8
  $region5: #{convblock_forward.1} parent=0 // loop_body
    %s16 = ssub.s32 %s11, 1
    %s17 = ssub.s32 %s11, 2
    %s24 = sadd.s32 1, %s19
    %p25 = scmp.ge.s32.totalorder %s24, 1
    %s26 = scalar_select %p25, 0, %s24
    %s27 = sadd.s32 1, %s18
    %s28 = scalar_select %p25, %s27, %s18
    %p29 = scmp.ge.s32.totalorder %s28, 2
    %s30 = scalar_select %p29, 0, %s28
    %s31 = ssub.s32 %s18, %s30
    %p32 = scmp.eq.s32.totalorder %s31, 0
    %s34 = sadd.s32 %s33, 1
    %s35 = scalar_select %p32, %s33, %s34
    %p38 = pneg %p32
    %p39 = scmp.eq.s32.totalorder %s11, 1
    %p40 = por %p38, %p39
    %p41 = scmp.ne.s32.totalorder %s33, %s36
    %p42 = scmp.eq.s32.totalorder %s11, 0
    %p43 = por %p41, %p42
    %p44 = scmp.ne.s32.totalorder %s33, %s36
    %p45 = scmp.eq.s32.totalorder %s16, 1
    %p46 = por %p44, %p45
    %p47 = scmp.ne.s32.totalorder %s36, %s37
    %p48 = scmp.eq.s32.totalorder %s16, 0
    %p49 = por %p47, %p48
    %p50 = scmp.ne.s32.totalorder %s36, %s37
    %p51 = scmp.eq.s32.totalorder %s17, 1
    %p52 = por %p50, %p51
    %p54 = scmp.ne.s32.totalorder %s37, %s53
    %p55 = scmp.eq.s32.totalorder %s17, 0
    %p56 = por %p54, %p55
    %s58 = sadd.s32 %s57, 1
    %p61 = scmp.eq.s32.totalorder %s11, 1
    %p62 = scmp.ne.s32.totalorder %s57, %s59
    %p63 = scmp.eq.s32.totalorder %s11, 0
    %p64 = por %p62, %p63
    %p65 = scmp.ne.s32.totalorder %s57, %s59
    %p66 = scmp.eq.s32.totalorder %s16, 1
    %p67 = por %p65, %p66
    %p68 = scmp.ne.s32.totalorder %s59, %s60
    %p69 = scmp.eq.s32.totalorder %s16, 0
    %p70 = por %p68, %p69
    %p71 = scmp.ne.s32.totalorder %s59, %s60
    %p72 = scmp.eq.s32.totalorder %s17, 1
    %p73 = por %p71, %p72
    %p75 = scmp.ne.s32.totalorder %s60, %s74
    %p76 = scmp.eq.s32.totalorder %s17, 0
    %p77 = por %p75, %p76
    %s79 = sadd.s32 %s78, 1
    %p82 = scmp.eq.s32.totalorder %s11, 1
    %p83 = scmp.ne.s32.totalorder %s78, %s80
    %p84 = scmp.eq.s32.totalorder %s11, 0
    %p85 = por %p83, %p84
    %p86 = scmp.ne.s32.totalorder %s78, %s80
    %p87 = scmp.eq.s32.totalorder %s16, 1
    %p88 = por %p86, %p87
    %p89 = scmp.ne.s32.totalorder %s80, %s81
    %p90 = scmp.eq.s32.totalorder %s16, 0
    %p91 = por %p89, %p90
    %p92 = scmp.ne.s32.totalorder %s80, %s81
    %p93 = scmp.eq.s32.totalorder %s17, 1
    %p94 = por %p92, %p93
    %p96 = scmp.ne.s32.totalorder %s81, %s95
    %p97 = scmp.eq.s32.totalorder %s17, 0
    %p98 = por %p96, %p97
    %s100 = sadd.s32 %s99, 1
    %p103 = scmp.eq.s32.totalorder %s11, 1
    %p104 = scmp.ne.s32.totalorder %s99, %s101
    %p105 = scmp.eq.s32.totalorder %s11, 0
    %p106 = por %p104, %p105
    %p107 = scmp.ne.s32.totalorder %s99, %s101
    %p108 = scmp.eq.s32.totalorder %s16, 1
    %p109 = por %p107, %p108
    %p110 = scmp.ne.s32.totalorder %s101, %s102
    %p111 = scmp.eq.s32.totalorder %s16, 0
    %p112 = por %p110, %p111
    %p113 = scmp.ne.s32.totalorder %s101, %s102
    %p114 = scmp.eq.s32.totalorder %s17, 1
    %p115 = por %p113, %p114
    %p117 = scmp.ne.s32.totalorder %s102, %s116
    %p118 = scmp.eq.s32.totalorder %s17, 0
    %p119 = por %p117, %p118
    %s121 = sadd.s32 %s120, 1
    %p124 = scmp.eq.s32.totalorder %s11, 1
    %p125 = scmp.ne.s32.totalorder %s120, %s122
    %p126 = scmp.eq.s32.totalorder %s11, 0
    %p127 = por %p125, %p126
    %p128 = scmp.ne.s32.totalorder %s120, %s122
    %p129 = scmp.eq.s32.totalorder %s16, 1
    %p130 = por %p128, %p129
    %p131 = scmp.ne.s32.totalorder %s122, %s123
    %p132 = scmp.eq.s32.totalorder %s16, 0
    %p133 = por %p131, %p132
    %p134 = scmp.ne.s32.totalorder %s122, %s123
    %p135 = scmp.eq.s32.totalorder %s17, 1
    %p136 = por %p134, %p135
    %p138 = scmp.ne.s32.totalorder %s123, %s137
    %p139 = scmp.eq.s32.totalorder %s17, 0
    %p140 = por %p138, %p139
    %s141 = ssub.s32 %s18, %s30
    %s142 = ssub.s32 %s19, %s26
    %s143 = sor.u32 %s141, %s142
    %p144 = scmp.eq.s32.totalorder %s143, 0
    %s146 = sadd.s32 %s145, 1
    %s147 = scalar_select %p144, %s145, %s146
    %p150 = pneg %p144
    %p151 = scmp.eq.s32.totalorder %s11, 1
    %p152 = por %p150, %p151
    %p153 = scmp.ne.s32.totalorder %s145, %s148
    %p154 = scmp.eq.s32.totalorder %s11, 0
    %p155 = por %p153, %p154
    %p156 = scmp.ne.s32.totalorder %s145, %s148
    %p157 = scmp.eq.s32.totalorder %s16, 1
    %p158 = por %p156, %p157
    %p159 = scmp.ne.s32.totalorder %s148, %s149
    %p160 = scmp.eq.s32.totalorder %s16, 0
    %p161 = por %p159, %p160
    %p162 = scmp.ne.s32.totalorder %s148, %s149
    %p163 = scmp.eq.s32.totalorder %s17, 1
    %p164 = por %p162, %p163
    %p166 = scmp.ne.s32.totalorder %s149, %s165
    %p167 = scmp.eq.s32.totalorder %s17, 0
    %p168 = por %p166, %p167
    %p169 = scmp.le.s32.totalorder 1, %s11
    %p170 = scmp.lt.s32.totalorder %s11, 3
    %p171 = pnand %p169, %p170
    %p172 = pneg %p171
    // Predicated region
    $region9: #{convblock_forward.1} parent=5 // pred_check
      _
    $region10: #{convblock_forward.1} parent=5 // pred_check_branch
      %174 = sbr.rel (%p171) target = $region12
    $region11: #{convblock_forward.1} parent=5 // pred_region
      %s175 = ssub.s32 %s11, 1
      // Predicated region
      $region13: #{convblock_forward.1} parent=11 // pred_check
        %p176 = pneg %p70
      $region14: #{convblock_forward.1} parent=11 // pred_check_branch
        %178 = sbr.rel (%p176) target = $region16
      $region15: #{convblock_forward.1} parent=11 // pred_region
        _
      $region16: #{convblock_forward.1} parent=11 // pred_fallthru
        _
      // Predicated region
      $region17: #{convblock_forward.1} parent=11 // pred_check
        %p179 = pneg %p91
      $region18: #{convblock_forward.1} parent=11 // pred_check_branch
        %181 = sbr.rel (%p179) target = $region20
      $region19: #{convblock_forward.1} parent=11 // pred_region
        _
      $region20: #{convblock_forward.1} parent=11 // pred_fallthru
        _
      // Predicated region
      $region21: #{convblock_forward.1} parent=11 // pred_check
        %p182 = pneg %p112
      $region22: #{convblock_forward.1} parent=11 // pred_check_branch
        %184 = sbr.rel (%p182) target = $region24
      $region23: #{convblock_forward.1} parent=11 // pred_region
        _
      $region24: #{convblock_forward.1} parent=11 // pred_fallthru
        _
      // Predicated region
      $region25: #{convblock_forward.1} parent=11 // pred_check
        %p185 = pneg %p133
      $region26: #{convblock_forward.1} parent=11 // pred_check_branch
        %187 = sbr.rel (%p185) target = $region28
      $region27: #{convblock_forward.1} parent=11 // pred_region
        _
      $region28: #{convblock_forward.1} parent=11 // pred_fallthru
        _
    $region12: #{convblock_forward.1} parent=5 // pred_fallthru
      _
    %p188 = scmp.lt.s32.totalorder %s11, 2
    // Predicated region
    $region29: #{convblock_forward.1} parent=5 // pred_check
      %p189 = pneg %p188
    $region30: #{convblock_forward.1} parent=5 // pred_check_branch
      %191 = sbr.rel (%p189) target = $region32
    $region31: #{convblock_forward.1} parent=5 // pred_region
      // Predicated region
      $region33: #{convblock_forward.1} parent=31 // pred_check
        %p192 = pneg %p43
      $region34: #{convblock_forward.1} parent=31 // pred_check_branch
        %194 = sbr.rel (%p192) target = $region36
      $region35: #{convblock_forward.1} parent=31 // pred_region
        %p195 = scmp.lt.s32.totalorder %s18, 1
        %s196 = scalar_select %p195, %s18, 1
        %s197 = smul.addr %s196, 2
        %s198 = smul.addr %s197, 8
        %s199 = scalar_lea.vmem %s0, %s198
      $region36: #{convblock_forward.1} parent=31 // pred_fallthru
        _
    $region32: #{convblock_forward.1} parent=5 // pred_fallthru
      _
    %p200 = scmp.le.s32.totalorder 1, %s11
    %p201 = scmp.lt.s32.totalorder %s11, 3
    %p202 = pnand %p200, %p201
    %p203 = pneg %p202
    // Predicated region
    $region37: #{convblock_forward.1} parent=5 // pred_check
      _
    $region38: #{convblock_forward.1} parent=5 // pred_check_branch
      %205 = sbr.rel (%p202) target = $region40
    $region39: #{convblock_forward.1} parent=5 // pred_region
      %s206 = ssub.s32 %s11, 1
      %p207 = scmp.lt.s32.totalorder %s20, 1
      %s208 = scalar_select %p207, %s20, 1
      %s209 = smul.addr %s208, 2
      %s210 = smul.addr %s209, 8
      %s211 = scalar_lea.vmem %s0, %s210
      %p212 = pneg %p49
      %p213 = pneg %p46
      %p214 = pneg %p70
      %p215 = pneg %p67
      %p216 = pneg %p91
      %p217 = pneg %p88
      %p218 = pneg %p112
      %p219 = pneg %p109
      %p220 = pneg %p133
      %p221 = pneg %p130
      %p222 = pneg %p161
      %p223 = pneg %p158
      %s224 = smul.u32 2, %s21
      %p225 = scmp.lt.s32.totalorder %s20, 1
      %s226 = scalar_select %p225, %s20, 1
      %p227 = scmp.lt.s32.totalorder %s224, 1
      %s228 = scalar_select %p227, %s224, 1
      %s229 = smul.addr %s226, 2
      %s230 = sadd.s32 %s228, %s229
      %s231 = smul.addr %s230, 8
      %s232 = scalar_lea.vmem %s5, %s231
      %p233 = scmp.lt.s32.totalorder %s20, 1
      %s234 = scalar_select %p233, %s20, 1
      %s235 = smul.addr %s234, 2
      %s236 = smul.addr %s235, 8
      %s237 = scalar_lea.vmem %s0, %s236
      %s238 = smul.u32 2, %s21
      %p239 = scmp.lt.s32.totalorder %s20, 1
      %s240 = scalar_select %p239, %s20, 1
      %p241 = scmp.lt.s32.totalorder %s238, 1
      %s242 = scalar_select %p241, %s238, 1
      %s243 = smul.addr %s240, 2
      %s244 = sadd.s32 %s242, %s243
      %s245 = smul.addr %s244, 8
      %s246 = scalar_lea.vmem %s5, %s245
      %s247 = smul.u32 2, %s21
      %s249 = smul.u32 %s21, 16
      %v250 = vld [vmem:[%s3] sm:$0x1]
      %v251 = vld [vmem:[%s4] sm:$0x1]
      %p252 = scmp.eq.s32.totalorder %s249, 0
      %s253 = ssub.s32 %s249, 1
      %s254 = scalar_select %p252, 1, %s253
      %s255 = sadd.s32 %s249, 16
      %p256 = scmp.eq.s32.totalorder %s255, 16
      %s257 = scalar_select %p256, 14, %s255
      %s258 = scalar_lea.vmem %s237, %s254
      %v259 = vld [vmem:[%s258] sm:$0x1]
      %v260 = vmul.f32 %v259, %v250
      %v261 = vadd.f32 %v260, %v251
      %v262 = vmax.f32 %v261, 0.0
      %vm263 = vcmask 516096
      %264 = vst.msk [vmem:[#allocation2] sm:$0x1] %vm263, %v262
      %s265 = scalar_lea.vmem %s237, %s249
      %v266 = vld [vmem:[%s265] sm:$0xff]
      %v267 = vld [vmem:[%s265 + $0x8] sm:$0xff]
      %v269 = vperm.slane %v250, 0
      %v271 = vmul.f32 %v266, %v269
      %v272 = vmul.f32 %v267, %v269
      %v274 = vperm.slane %v251, 0
      %v276 = vadd.f32 %v271, %v274
      %v277 = vadd.f32 %v272, %v274
      %v278 = vmax.f32 %v276, 0.0
      %v279 = vmax.f32 %v277, 0.0
      %vm280 = vcmask 523264
      %281 = vst.msk [vmem:[#allocation2 + $0x1] sm:$0xff] %vm280, %v278
      %282 = vst.msk [vmem:[#allocation2 + $0x9] sm:$0xff] %vm280, %v279
      %s283 = scalar_lea.vmem %s237, %s257
      %v284 = vld [vmem:[%s283] sm:$0x1]
      %v285 = vmul.f32 %v284, %v250
      %v286 = vadd.f32 %v285, %v251
      %v287 = vmax.f32 %v286, 0.0
      %288 = vst.msk [vmem:[#allocation2 + $0x11] sm:$0x1] %vm263, %v287
      %v289 = vld [vmem:[%s2] sm:$0x1]
      %v291 = vperm.slane %v289, 0
      %v293 = vld [vmem:[#allocation2] sm:$0xff]
      %v294 = vld [vmem:[#allocation2 + $0x8] sm:$0xff]
      %v295 = vpack.c.bf16 %v294, %v293
      %v296 = vld [vmem:[%s1] sm:$0xf]
      %v297 = vld [vmem:[%s1 + $0x4] sm:$0xf]
      %v298 = vld [vmem:[%s1 + $0x8] sm:$0xf]
      %v299 = vld [vmem:[%s1 + $0xc] sm:$0xf]
      %v300 = vld [vmem:[%s1 + $0x10] sm:$0xf]
      %v301 = vld [vmem:[%s1 + $0x14] sm:$0xf]
      %v302 = vld [vmem:[%s1 + $0x18] sm:$0xf]
      %v303 = vld [vmem:[%s1 + $0x1c] sm:$0xf]
      %v312 = vunpack.c.l.b16 %v296
      %v313 = vunpack.c.l.b16 %v297
      %v314 = vunpack.c.l.b16 %v298
      %v315 = vunpack.c.l.b16 %v299
      %v316 = vunpack.c.l.b16 %v300
      %v317 = vunpack.c.l.b16 %v301
      %v318 = vunpack.c.l.b16 %v302
      %v319 = vunpack.c.l.b16 %v303
      %v320 = vpack.c.b16 %v313, %v312
      %v321 = vpack.c.b16 %v315, %v314
      %v322 = vpack.c.b16 %v317, %v316
      %v323 = vpack.c.b16 %v319, %v318
      %v329 = vsel %vm280, %v295, 0
      %331 = vmatpush.bf16.msra.mxu0 0
      %332 = vmatpush.bf16.msra.mxu0 0
      %333 = vmatpush.bf16.msra.mxu0 0
      %334 = vmatpush.bf16.msra.mxu0 0
      %335 = vmatpush.bf16.msra.mxu0 %v323
      %336 = vmatpush.bf16.msra.mxu0 %v322
      %337 = vmatpush.bf16.msra.mxu0 %v321
      %338 = vmatpush.bf16.msra.mxu0 %v320
      %339 = vmatmul.bf16.gmra.mxu0 %v329
      %v340 = vpop.f32.mrf.mxu0
      %v341 = vadd.f32 0.0, %v340
      %v342 = vpop.f32.mrf.mxu0
      %v343 = vadd.f32 0.0, %v342
      %344 = vdwg.mxu0
      %v345 = vadd.f32 %v291, %v341
      %v346 = vadd.f32 %v291, %v343
      %v347 = vld [vmem:[#allocation2 + $0x1] sm:$0xff]
      %v348 = vld [vmem:[#allocation2 + $0x9] sm:$0xff]
      %v349 = vpack.c.bf16 %v348, %v347
      %s350 = scalar_lea.vmem %s1, 32
      %v351 = vld [vmem:[%s350] sm:$0xf]
      %v352 = vld [vmem:[%s350 + $0x4] sm:$0xf]
      %v353 = vld [vmem:[%s350 + $0x8] sm:$0xf]
      %v354 = vld [vmem:[%s350 + $0xc] sm:$0xf]
      %v355 = vld [vmem:[%s350 + $0x10] sm:$0xf]
      %v356 = vld [vmem:[%s350 + $0x14] sm:$0xf]
      %v357 = vld [vmem:[%s350 + $0x18] sm:$0xf]
      %v358 = vld [vmem:[%s350 + $0x1c] sm:$0xf]
      %v367 = vunpack.c.l.b16 %v351
      %v368 = vunpack.c.l.b16 %v352
      %v369 = vunpack.c.l.b16 %v353
      %v370 = vunpack.c.l.b16 %v354
      %v371 = vunpack.c.l.b16 %v355
      %v372 = vunpack.c.l.b16 %v356
      %v373 = vunpack.c.l.b16 %v357
      %v374 = vunpack.c.l.b16 %v358
      %v375 = vpack.c.b16 %v368, %v367
      %v376 = vpack.c.b16 %v370, %v369
      %v377 = vpack.c.b16 %v372, %v371
      %v378 = vpack.c.b16 %v374, %v373
      %v384 = vsel %vm280, %v349, 0
      %386 = vmatpush.bf16.msra.mxu0 0
      %387 = vmatpush.bf16.msra.mxu0 0
      %388 = vmatpush.bf16.msra.mxu0 0
      %389 = vmatpush.bf16.msra.mxu0 0
      %390 = vmatpush.bf16.msra.mxu0 %v378
      %391 = vmatpush.bf16.msra.mxu0 %v377
      %392 = vmatpush.bf16.msra.mxu0 %v376
      %393 = vmatpush.bf16.msra.mxu0 %v375
      %394 = vmatmul.bf16.gmra.mxu0 %v384
      %v395 = vpop.f32.mrf.mxu0
      %v396 = vadd.f32 0.0, %v395
      %v397 = vpop.f32.mrf.mxu0
      %v398 = vadd.f32 0.0, %v397
      %399 = vdwg.mxu0
      %v400 = vadd.f32 %v345, %v396
      %v401 = vadd.f32 %v346, %v398
      %v402 = vld [vmem:[#allocation2 + $0x2] sm:$0xff]
      %v403 = vld [vmem:[#allocation2 + $0xa] sm:$0xff]
      %v404 = vpack.c.bf16 %v403, %v402
      %s405 = scalar_lea.vmem %s1, 64
      %v406 = vld [vmem:[%s405] sm:$0xf]
      %v407 = vld [vmem:[%s405 + $0x4] sm:$0xf]
      %v408 = vld [vmem:[%s405 + $0x8] sm:$0xf]
      %v409 = vld [vmem:[%s405 + $0xc] sm:$0xf]
      %v410 = vld [vmem:[%s405 + $0x10] sm:$0xf]
      %v411 = vld [vmem:[%s405 + $0x14] sm:$0xf]
      %v412 = vld [vmem:[%s405 + $0x18] sm:$0xf]
      %v413 = vld [vmem:[%s405 + $0x1c] sm:$0xf]
      %v422 = vunpack.c.l.b16 %v406
      %v423 = vunpack.c.l.b16 %v407
      %v424 = vunpack.c.l.b16 %v408
      %v425 = vunpack.c.l.b16 %v409
      %v426 = vunpack.c.l.b16 %v410
      %v427 = vunpack.c.l.b16 %v411
      %v428 = vunpack.c.l.b16 %v412
      %v429 = vunpack.c.l.b16 %v413
      %v430 = vpack.c.b16 %v423, %v422
      %v431 = vpack.c.b16 %v425, %v424
      %v432 = vpack.c.b16 %v427, %v426
      %v433 = vpack.c.b16 %v429, %v428
      %v439 = vsel %vm280, %v404, 0
      %441 = vmatpush.bf16.msra.mxu0 0
      %442 = vmatpush.bf16.msra.mxu0 0
      %443 = vmatpush.bf16.msra.mxu0 0
      %444 = vmatpush.bf16.msra.mxu0 0
      %445 = vmatpush.bf16.msra.mxu0 %v433
      %446 = vmatpush.bf16.msra.mxu0 %v432
      %447 = vmatpush.bf16.msra.mxu0 %v431
      %448 = vmatpush.bf16.msra.mxu0 %v430
      %449 = vmatmul.bf16.gmra.mxu0 %v439
      %v450 = vpop.f32.mrf.mxu0
      %v451 = vadd.f32 0.0, %v450
      %v452 = vpop.f32.mrf.mxu0
      %v453 = vadd.f32 0.0, %v452
      %454 = vdwg.mxu0
      %v455 = vadd.f32 %v400, %v451
      %v456 = vadd.f32 %v401, %v453
      %457 = vst [vmem:[%s246] sm:$0xff] %v455
      %458 = vst [vmem:[%s246 + $0x8] sm:$0xff] %v456
      %s459 = smul.u32 2, %s21
      %p460 = scmp.lt.s32.totalorder %s20, 1
      %s461 = scalar_select %p460, %s20, 1
      %p462 = scmp.lt.s32.totalorder %s459, 1
      %s463 = scalar_select %p462, %s459, 1
      %s464 = smul.addr %s461, 2
      %s465 = sadd.s32 %s463, %s464
      %s466 = smul.addr %s465, 8
      %s467 = scalar_lea.vmem %s5, %s466
      // Predicated region
      $region41: #{convblock_forward.1} parent=39 // pred_check
        %p468 = pneg %p158
      $region42: #{convblock_forward.1} parent=39 // pred_check_branch
        %470 = sbr.rel (%p468) target = $region44
      $region43: #{convblock_forward.1} parent=39 // pred_region
        %s471 = smul.u32 2, %s21
      $region44: #{convblock_forward.1} parent=39 // pred_fallthru
        _
    $region40: #{convblock_forward.1} parent=5 // pred_fallthru
      _
    %p472 = scmp.le.s32.totalorder 2, %s11
    // Predicated region
    $region45: #{convblock_forward.1} parent=5 // pred_check
      %p473 = pneg %p472
    $region46: #{convblock_forward.1} parent=5 // pred_check_branch
      %475 = sbr.rel (%p473) target = $region48
    $region47: #{convblock_forward.1} parent=5 // pred_region
      %s476 = ssub.s32 %s11, 2
      // Predicated region
      $region49: #{convblock_forward.1} parent=47 // pred_check
        %p477 = pneg %p164
      $region50: #{convblock_forward.1} parent=47 // pred_check_branch
        %479 = sbr.rel (%p477) target = $region52
      $region51: #{convblock_forward.1} parent=47 // pred_region
        %s480 = smul.u32 2, %s23
        %p481 = scmp.lt.s32.totalorder %s22, 1
        %s482 = scalar_select %p481, %s22, 1
        %p483 = scmp.lt.s32.totalorder %s480, 1
        %s484 = scalar_select %p483, %s480, 1
        %s485 = smul.addr %s482, 2
        %s486 = sadd.s32 %s484, %s485
        %s487 = smul.addr %s486, 8
        %s488 = scalar_lea.vmem %s5, %s487
      $region52: #{convblock_forward.1} parent=47 // pred_fallthru
        _
    $region48: #{convblock_forward.1} parent=5 // pred_fallthru
      _
  $region6: #{convblock_forward.1} parent=0 // loop_footer
    %s15 = sadd.s32 1, %s11
  $region7: #{convblock_forward.1} parent=0 // loop_footer_branch
    %10 = sbr.rel target = $region3
  $region8: #{convblock_forward.1} parent=0 // loop_exit
    _

</llo_original>
